<compile_context>
chip_gen: v7x
topology: tpu7x:2x2x1
jax: 0.10.0
libtpu: 0.0.40
codegen_flags: <defaults>
</compile_context>

<pallas_src>
import functools

import jax
import jax.numpy as jnp
from jax.experimental import pallas as pl
from jax.experimental.pallas import tpu as pltpu

_SUBLANE = 8


def _js_partial_kernel(p_ref, q_ref, out_ref, *, rows_total, tile_rows):
    # Global row ids of this tile -> mask for the (possibly ragged) last tile.
    row0 = pl.program_id(0) * tile_rows
    row_ids = row0 + jax.lax.broadcasted_iota(jnp.int32, (tile_rows, 1), 0)
    valid = row_ids < rows_total                                 # [TR, 1]

    one = jnp.float32(1.0)
    # In-kernel upcast: DMA moves the native dtype; compute is f32 on the VPU.
    # Invalid (out-of-range) rows are replaced by p = q = 1 -> js == 0 exactly,
    # so stale VMEM in the ragged tail never perturbs the result.
    p = jnp.where(valid, p_ref[...].astype(jnp.float32), one)    # [TR, D]
    q = jnp.where(valid, q_ref[...].astype(jnp.float32), one)

    m = jnp.log(0.5 * (p + q))
    # KLDivLoss(m, log t, log_target=True, reduction='none') = t * (log t - m)
    js = 0.5 * (p * (jnp.log(p) - m) + q * (jnp.log(q) - m))     # [TR, D]

    # Lane-dense per-tile partial: reduce only the row (sublane) axis here;
    # the cheap cross-tile sum happens outside the kernel.
    out_ref[...] = jnp.sum(js, axis=0, keepdims=True)[None]      # [1, 1, D]


def _choose_tile_rows(R, D):
    """Largest row tile that keeps the double-buffered windows well inside VMEM."""
    # 2 inputs x 2 pipeline buffers x TR x D x 4B (+ in-kernel f32 temporaries);
    # budget chosen to stay comfortably under the default scoped VMEM limit on
    # every generation (16 MiB v5e, 32 MiB v6e/v7x; v7x physical VMEM = 64 MiB).
    budget_bytes = 6 * 1024 * 1024
    max_tr = (budget_bytes // (4 * D * 4)) // _SUBLANE * _SUBLANE
    max_tr = max(_SUBLANE, max_tr)
    r_pad8 = ((max(R, 1) + _SUBLANE - 1) // _SUBLANE) * _SUBLANE
    return max(_SUBLANE, min(2048, max_tr, r_pad8))


@jax.jit
def js_divergence(p, q):
    """Pallas implementation of JSDivergence.forward(p, q)."""
    assert p.shape == q.shape, "p and q must have the same shape"
    D = p.shape[-1]
    lead = p.shape[:-1]
    R = 1
    for s in lead:
        R *= s

    # Normalization is decided by the *original* rank (matches the torch branch).
    if len(lead) >= 2:
        n = p.shape[0]
        divisor = float(n * (n - 1))              # js.sum() / (n*(n-1))
    else:
        divisor = float(max(R, 1))                # js.mean()

    TR = _choose_tile_rows(R, D)
    num_tiles = pl.cdiv(max(R, 1), TR)

    p2 = p.reshape(R, D)                          # keep native dtype (no astype)
    q2 = q.reshape(R, D)

    kernel = functools.partial(_js_partial_kernel, rows_total=R, tile_rows=TR)

    partials = pl.pallas_call(
        kernel,
        out_shape=jax.ShapeDtypeStruct((num_tiles, 1, D), jnp.float32),
        grid=(num_tiles,),
        in_specs=[
            pl.BlockSpec((TR, D), lambda i: (i, 0)),
            pl.BlockSpec((TR, D), lambda i: (i, 0)),
        ],
        out_specs=pl.BlockSpec((1, 1, D), lambda i: (i, 0, 0)),
        compiler_params=pltpu.CompilerParams(
            dimension_semantics=("parallel",)),
    )(p2, q2)

    # Tiny cross-tile reduction + normalization on [num_tiles, 1, D] values.
    return jnp.sum(partials) * (1.0 / divisor)


def _js_reference(p, q):
    """Pure-JAX mirror of the PyTorch forward (for verification)."""
    m = jnp.log(0.5 * (p + q))
    js = 0.5 * (p * (jnp.log(p) - m) + q * (jnp.log(q) - m))
    js = js.sum(-1)
    if js.ndim >= 2:
        n = js.shape[0]
        return js.sum() / (n * (n - 1))
    return js.mean()


if __name__ == "__main__":
    key = jax.random.PRNGKey(0)
    k1, k2, k3, k4, k5, k6, k7, k8 = jax.random.split(key, 8)

    # Case 1: 2-D [B, D] -> js_div.dim() == 1 -> mean branch.
    B, D = 8, 128
    p2d = jax.nn.softmax(jax.random.normal(k1, (B, D), jnp.float32), axis=-1)
    q2d = jax.nn.softmax(jax.random.normal(k2, (B, D), jnp.float32), axis=-1)
    out2d = jax.block_until_ready(js_divergence(p2d, q2d))
    ref2d = _js_reference(p2d, q2d)
    assert jnp.allclose(out2d, ref2d, atol=1e-5, rtol=1e-5), (out2d, ref2d)

    # Case 2: 3-D [N, B, D] -> js_div.dim() == 2 -> sum / (n*(n-1)) branch.
    N = 4
    p3d = jax.nn.softmax(jax.random.normal(k3, (N, B, D), jnp.float32), axis=-1)
    q3d = jax.nn.softmax(jax.random.normal(k4, (N, B, D), jnp.float32), axis=-1)
    out3d = jax.block_until_ready(js_divergence(p3d, q3d))
    ref3d = _js_reference(p3d, q3d)
    assert jnp.allclose(out3d, ref3d, atol=1e-5, rtol=1e-5), (out3d, ref3d)

    # Case 3: odd row count + small D (exercises ragged-tile masking, D != 128).
    p3o = jax.nn.softmax(jax.random.normal(k5, (3, 5, 32), jnp.float32), axis=-1)
    q3o = jax.nn.softmax(jax.random.normal(k6, (3, 5, 32), jnp.float32), axis=-1)
    out3o = jax.block_until_ready(js_divergence(p3o, q3o))
    ref3o = _js_reference(p3o, q3o)
    assert jnp.allclose(out3o, ref3o, atol=1e-5, rtol=1e-5), (out3o, ref3o)

    # Case 4: 4-D input -> still the n*(n-1) branch with n = shape[0].
    p4d = jax.nn.softmax(jax.random.normal(k7, (2, 3, 4, 32), jnp.float32), axis=-1)
    q4d = jax.nn.softmax(jax.random.normal(k8, (2, 3, 4, 32), jnp.float32), axis=-1)
    out4d = jax.block_until_ready(js_divergence(p4d, q4d))
    ref4d = _js_reference(p4d, q4d)
    assert jnp.allclose(out4d, ref4d, atol=1e-5, rtol=1e-5), (out4d, ref4d)

    # Case 5: bf16 inputs stay bf16 in HBM; upcast happens inside the kernel.
    pb = p3d.astype(jnp.bfloat16)
    qb = q3d.astype(jnp.bfloat16)
    outb = jax.block_until_ready(js_divergence(pb, qb))
    refb = _js_reference(pb.astype(jnp.float32), qb.astype(jnp.float32))
    assert jnp.allclose(outb, refb, atol=2e-3, rtol=2e-3), (outb, refb)

    print("KERNEL_OK")
</pallas_src>

<mosaic_0001>
module attributes {stable_mosaic.version = 11 : i64} {
  func.func @_js_partial_kernel(%arg0: i32, %arg1: memref<8x128xf32, #tpu.memory_space<vmem>>, %arg2: memref<8x128xf32, #tpu.memory_space<vmem>>, %arg3: memref<1x1x128xf32, #tpu.memory_space<vmem>>) attributes {dimension_semantics = [#tpu.dimension_semantics<parallel>], iteration_bounds = array<i64: 1>, scalar_prefetch = 0 : i64, scratch_operands = 0 : i64, tpu.core_type = #tpu.core_type<tc>, window_params = [{transform_indices = @transform_0, window_bounds = array<i64: 8, 128>}, {transform_indices = @transform_1, window_bounds = array<i64: 8, 128>}, {transform_indices = @transform_2, window_bounds = array<i64: 1, 1, 128>}]} {
    %c8_i32 = arith.constant 8 : i32
    %0 = arith.muli %arg0, %c8_i32 : i32
    %1 = tpu.iota {dimensions = array<i32: 0>} : vector<8x1xi32>
    %2 = vector.broadcast %0 : i32 to vector<8x1xi32>
    %3 = arith.addi %2, %1 : vector<8x1xi32>
    %c8_i32_0 = arith.constant 8 : i32
    %4 = vector.broadcast %c8_i32_0 : i32 to vector<8x1xi32>
    %5 = arith.cmpi slt, %3, %4 : vector<8x1xi32>
    %c0 = arith.constant 0 : index
    %c0_1 = arith.constant 0 : index
    %6 = vector.load %arg1[%c0, %c0_1] : memref<8x128xf32, #tpu.memory_space<vmem>>, vector<8x128xf32>
    %cst = arith.constant 1.000000e+00 : f32
    %7 = vector.shape_cast %5 : vector<8x1xi1> to vector<8x1xi1>
    %8 = vector.broadcast %7 : vector<8x1xi1> to vector<8x128xi1>
    %9 = vector.broadcast %cst : f32 to vector<8x128xf32>
    %10 = arith.select %8, %6, %9 : vector<8x128xi1>, vector<8x128xf32>
    %c0_2 = arith.constant 0 : index
    %c0_3 = arith.constant 0 : index
    %11 = vector.load %arg2[%c0_2, %c0_3] : memref<8x128xf32, #tpu.memory_space<vmem>>, vector<8x128xf32>
    %cst_4 = arith.constant 1.000000e+00 : f32
    %12 = vector.shape_cast %5 : vector<8x1xi1> to vector<8x1xi1>
    %13 = vector.broadcast %12 : vector<8x1xi1> to vector<8x128xi1>
    %14 = vector.broadcast %cst_4 : f32 to vector<8x128xf32>
    %15 = arith.select %13, %11, %14 : vector<8x128xi1>, vector<8x128xf32>
    %16 = arith.addf %10, %15 : vector<8x128xf32>
    %cst_5 = arith.constant 5.000000e-01 : f32
    %17 = vector.broadcast %cst_5 : f32 to vector<8x128xf32>
    %18 = arith.mulf %17, %16 : vector<8x128xf32>
    %19 = math.log %18 : vector<8x128xf32>
    %20 = math.log %10 : vector<8x128xf32>
    %21 = arith.subf %20, %19 : vector<8x128xf32>
    %22 = arith.mulf %10, %21 : vector<8x128xf32>
    %23 = math.log %15 : vector<8x128xf32>
    %24 = arith.subf %23, %19 : vector<8x128xf32>
    %25 = arith.mulf %15, %24 : vector<8x128xf32>
    %26 = arith.addf %22, %25 : vector<8x128xf32>
    %cst_6 = arith.constant 5.000000e-01 : f32
    %27 = vector.broadcast %cst_6 : f32 to vector<8x128xf32>
    %28 = arith.mulf %27, %26 : vector<8x128xf32>
    %cst_7 = arith.constant dense<0.000000e+00> : vector<128xf32>
    %29 = vector.multi_reduction <add>, %28, %cst_7 [0] : vector<8x128xf32> to vector<128xf32>
    %30 = vector.shape_cast %29 : vector<128xf32> to vector<1x128xf32>
    %31 = vector.shape_cast %30 : vector<1x128xf32> to vector<1x1x128xf32>
    %c0_8 = arith.constant 0 : index
    %c0_9 = arith.constant 0 : index
    %c0_10 = arith.constant 0 : index
    %32 = vector.load %arg3[%c0_8, %c0_9, %c0_10] : memref<1x1x128xf32, #tpu.memory_space<vmem>>, vector<1x1x128xf32>
    tpu.vector_store %arg3[%c0_8, %c0_9, %c0_10], %31 {strides = array<i32>} : memref<1x1x128xf32, #tpu.memory_space<vmem>>, vector<1x1x128xf32>,
    return
  }
  func.func @transform_0(%arg0: i32) -> (i32, i32) {
    %c0_i32 = arith.constant 0 : i32
    %c0_i32_0 = arith.constant 0 : i32
    return %arg0, %c0_i32 : i32, i32
  }
  func.func @transform_1(%arg0: i32) -> (i32, i32) {
    %c0_i32 = arith.constant 0 : i32
    %c0_i32_0 = arith.constant 0 : i32
    return %arg0, %c0_i32 : i32, i32
  }
  func.func @transform_2(%arg0: i32) -> (i32, i32, i32) {
    %c0_i32 = arith.constant 0 : i32
    %c0_i32_0 = arith.constant 0 : i32
    %c0_i32_1 = arith.constant 0 : i32
    return %arg0, %c0_i32, %c0_i32_0 : i32, i32, i32
  }
}

</mosaic_0001>

<llo_original>
// kernel: js_divergence.1
$region0: #{js_divergence.1}
  #allocation0 [shape = 'u32[]', space=smem, size = 0x4, offset = 0x4, fixed_abs, tag = 'smem constant byte address 0x4 - core index']
  #allocation1 [shape = 'u32[144,128]{1,0:T(1,128)}', space=vmem, size = 0x12000, scoped, tag = 'internal scratch']
  %s0 = inlined_call_operand.hbm [shape: f32[8,128], index: 0, kind: input, shape index: {}]
  %s1 = inlined_call_operand.hbm [shape: f32[8,128], index: 1, kind: input, shape index: {}]
  %s2 = inlined_call_operand.vmem [shape: f32[1,1,128], index: 2, kind: output, shape index: {}]
  %s3 = sld [smem:[#allocation0]]
  $region26: #{js_divergence.1} parent=0
    _
  %s5 = ssub.s32 1, %s3
  %s6 = scalar_select 0, %s5, %s3
  $region1: #{js_divergence.1} parent=0
    #allocation2 [shape = 'u8[4096]{0}', space=vmem, size = 0x1000, scoped, tag = 'input window, operand 0, single buffered']
    #allocation3 [shape = 's32[1]{0}', space=sflag, size = 0x4, scoped, tag = 'scoped memory for js_divergence.1']
    #allocation4 [shape = 'u8[4096]{0}', space=vmem, size = 0x1000, scoped, tag = 'input window, operand 1, single buffered']
    #allocation5 [shape = 's32[1]{0}', space=sflag, size = 0x4, scoped, tag = 'scoped memory for js_divergence.1']
    %7 = vsyncpa [#allocation3], 0
    %8 = vsyncpa [#allocation5], 0
    // Predicated region
    $region2: #{js_divergence.1} parent=1 // pred_check
      _
    $region3: #{js_divergence.1} parent=1 // pred_check_branch
      %10 = sbr.rel (0) target = $region5
    $region4: #{js_divergence.1} parent=1 // pred_region
      %s12 = ssub.s32 128, 128
      %13 = vsyncadd [#allocation3], %s12
      %s15 = sshll.u32 [#allocation2], 4
      %s16 = int_to_ptr.vmem [resolvable:$true] %s15
      %18 = dma.hbm_to_vmem [thread:$0]  %s0, 128, %s16, [#allocation3]
    $region5: #{js_divergence.1} parent=1 // pred_fallthru
      _
    // Predicated region
    $region6: #{js_divergence.1} parent=1 // pred_check
      _
    $region7: #{js_divergence.1} parent=1 // pred_check_branch
      %20 = sbr.rel (0) target = $region9
    $region8: #{js_divergence.1} parent=1 // pred_region
      %s22 = ssub.s32 128, 128
      %23 = vsyncadd [#allocation5], %s22
      %s25 = sshll.u32 [#allocation4], 4
      %s26 = int_to_ptr.vmem [resolvable:$true] %s25
      %28 = dma.hbm_to_vmem [thread:$0]  %s1, 128, %s26, [#allocation5]
    $region9: #{js_divergence.1} parent=1 // pred_fallthru
      _
    // Predicated region
    $region10: #{js_divergence.1} parent=1 // pred_check
      _
    $region11: #{js_divergence.1} parent=1 // pred_check_branch
      %30 = sbr.rel (0) target = $region13
    $region12: #{js_divergence.1} parent=1 // pred_region
      %31 = dma.done [#allocation3], 128
    $region13: #{js_divergence.1} parent=1 // pred_fallthru
      _
    // Predicated region
    $region14: #{js_divergence.1} parent=1 // pred_check
      _
    $region15: #{js_divergence.1} parent=1 // pred_check_branch
      %33 = sbr.rel (0) target = $region17
    $region16: #{js_divergence.1} parent=1 // pred_region
      %34 = dma.done [#allocation5], 128
    $region17: #{js_divergence.1} parent=1 // pred_fallthru
      _
    %s35 = smul.u32 0, 8
    %v36 = vlaneseq
    %v37 = vshrl.u32 %v36, 7
    %v38 = vstv %s35
    %v39 = vadd.s32 %v38, %v37
    %vm40 = vcmp.lt.s32.totalorder %v39, 8
    %v41 = vld [vmem:[#allocation2] sm:$0xff]
    %v42 = vsel %vm40, 1, 0
    %vm43 = vcmp.eq.s32.totalorder %v42, 1
    %v44 = vsel %vm43, %v41, 1.0
    %v45 = vld [vmem:[#allocation4] sm:$0xff]
    %v46 = vsel %vm43, %v45, 1.0
    %v47 = vadd.f32 %v44, %v46
    %v48 = vmul.f32 %v47, 0.5
    %v49 = vlog2.pop %v48
    %v50 = vmul.f32 %v49, 0.6931472
    %v51 = vlog2.pop %v44
    %v52 = vmul.f32 %v51, 0.6931472
    %v53 = vsub.f32 %v52, %v50
    %v54 = vmul.f32 %v44, %v53
    %v55 = vlog2.pop %v46
    %v56 = vmul.f32 %v55, 0.6931472
    %v57 = vsub.f32 %v56, %v50
    %v58 = vmul.f32 %v46, %v57
    %v59 = vadd.f32 %v54, %v58
    %v60 = vmul.f32 %v59, 0.5
    %v61 = vrot.slane %v60, 4
    %v62 = vadd.f32 %v60, %v61
    %v63 = vrot.slane %v62, 2
    %v64 = vadd.f32 %v62, %v63
    %v65 = vrot.slane %v64, 1
    %v66 = vadd.f32 %v64, %v65
    %67 = vst [vmem:[%s2] sm:$0x1] %v66
    // Predicated region
    $region18: #{js_divergence.1} parent=1 // pred_check
      _
    $region19: #{js_divergence.1} parent=1 // pred_check_branch
      %69 = sbr.rel (0) target = $region21
    $region20: #{js_divergence.1} parent=1 // pred_region
      _
    $region21: #{js_divergence.1} parent=1 // pred_fallthru
      _
    // Predicated region
    $region22: #{js_divergence.1} parent=1 // pred_check
      _
    $region23: #{js_divergence.1} parent=1 // pred_check_branch
      %71 = sbr.rel (0) target = $region25
    $region24: #{js_divergence.1} parent=1 // pred_region
      _
    $region25: #{js_divergence.1} parent=1 // pred_fallthru
      _
    %72 = vsyncpa [#allocation3], 1
    %73 = vsyncpa [#allocation5], 1

</llo_original>
